<compile_context>
chip_gen: v7x
topology: tpu7x:2x2x1
jax: 0.10.0
libtpu: 0.0.40
codegen_flags: <defaults>
</compile_context>

<pallas_src>
import jax
import jax.numpy as jnp
from jax.experimental import pallas as pl
from jax.experimental.pallas import tpu as pltpu


_LANE = 128
# Per-block byte budget.  Double-buffered in + out => ~4x this live in VMEM
# (~8 MiB), comfortably inside the scoped-VMEM defaults on v5e (16 MiB),
# v6e (32 MiB) and v7x (32 MiB scoped / 64 MiB physical).
_MAX_BLOCK_BYTES = 2 * 1024 * 1024


def _copy_kernel(idx_ref, x_ref, o_ref):
    # idx_ref lives in SMEM (scalar prefetch) and is only consumed by the
    # index_maps; the body is a straight VMEM tile copy.
    del idx_ref
    o_ref[...] = x_ref[...]


def _sublane_multiple(itemsize):
    # Packed sublane granularity: f32 -> 8, bf16/f16 -> 16, int8/fp8 -> 32.
    return max(8, 8 * (4 // max(1, itemsize)))


def _plan_lane_dense(total, itemsize):
    """Return (rows, cols, tile_rows) for a lane-dense 2-D layout, or None."""
    if total % _LANE != 0:
        return None
    sub = _sublane_multiple(itemsize)
    # Widest lane-dense cols first (fewer, fatter grid steps); prefer a choice
    # that leaves rows a multiple of the sublane pack so row tiles stay aligned.
    best = None
    for c in (2048, 1024, 512, 256, 128):
        if total % c == 0:
            rows = total // c
            if best is None:
                best = (rows, c)
            if rows % sub == 0:
                best = (rows, c)
                break
    rows, cols = best
    # Largest row tile that is a multiple of `sub`, divides rows and stays
    # inside the per-block byte budget.
    max_tile = max(sub, _MAX_BLOCK_BYTES // (cols * itemsize))
    tile = (max_tile // sub) * sub
    while tile >= sub:
        if rows % tile == 0:
            return rows, cols, tile
        tile -= sub
    # rows is small (or not sublane aligned): full-extent block is always legal.
    return rows, cols, rows


def _plan_fallback_tiling(rest, itemsize):
    """Tile extent along rest[0] for a non-lane-dense slice, or None.

    None means "use a single whole-slice block" (always legal: last two block
    dims equal the full array dims).
    """
    if len(rest) < 2 or rest[0] <= 1:
        return None
    inner = 1
    for d in rest[1:]:
        inner *= d
    if rest[0] * inner * itemsize <= _MAX_BLOCK_BYTES:
        return None  # whole slice is small; one block is fine
    budget_rows = max(1, _MAX_BLOCK_BYTES // (inner * itemsize))
    if len(rest) == 2:
        # rest[0] is the sublane dim of the block: tile must be a multiple of
        # the packed sublane count (or the full extent via the None fallback).
        sub = _sublane_multiple(itemsize)
        tile = (min(budget_rows, rest[0]) // sub) * sub
        while tile >= sub:
            if rest[0] % tile == 0:
                return tile
            tile -= sub
        return None
    # len(rest) >= 3: rest[0] is not among the last-two dims; any divisor works.
    tile = min(budget_rows, rest[0])
    while tile >= 1:
        if rest[0] % tile == 0:
            return tile
        tile -= 1
    return None


def select_item(inputs, item_index):
    """Pallas implementation of SelectItem.forward."""
    if isinstance(inputs, (tuple, list)):
        # Container indexing is plain Python glue (e.g. LSTM (out, (h, c))).
        return inputs[item_index]

    x = jnp.asarray(inputs)
    num_items = x.shape[0]

    if isinstance(item_index, int):
        assert -num_items <= item_index < num_items, "item_index out of range"
    # Normalize negative indices; works for Python ints and traced scalars.
    idx = jnp.asarray(item_index, dtype=jnp.int32)
    idx = jnp.where(idx < 0, idx + num_items, idx).reshape((1,))

    if x.ndim < 2:
        # Degenerate (one scalar per item): nothing worth a kernel.
        return x[idx[0]]

    rest = x.shape[1:]
    total = 1
    for d in rest:
        total *= d
    itemsize = jnp.dtype(x.dtype).itemsize

    plan = _plan_lane_dense(total, itemsize)
    if plan is not None:
        # Lane-dense, multi-step pipelined copy path.
        rows, cols, tile = plan
        x2 = x.reshape(num_items, rows, cols)
        grid = (rows // tile,)
        in_spec = pl.BlockSpec(
            (pl.Squeezed(), tile, cols),
            lambda r, idx_ref: (idx_ref[0], r, 0),
        )
        out_spec = pl.BlockSpec((tile, cols), lambda r, idx_ref: (r, 0))
        out_shape = jax.ShapeDtypeStruct((rows, cols), x.dtype)
        dim_sem = ("parallel",)  # shards the row grid across v7x's 2 TCs
    elif len(rest) == 1:
        # 1-D, non-lane-dense slice: too small/ragged to earn a kernel.
        return x[idx[0]]
    else:
        tile0 = _plan_fallback_tiling(rest, itemsize)
        tail = tuple(rest[1:])
        x2 = x
        out_shape = jax.ShapeDtypeStruct(tuple(rest), x.dtype)
        if tile0 is not None:
            # Large non-lane-dense slice: tile the leading slice axis so the
            # copy still pipelines and never overshoots VMEM.
            grid = (rest[0] // tile0,)
            in_spec = pl.BlockSpec(
                (pl.Squeezed(), tile0) + tail,
                lambda r, idx_ref: (idx_ref[0], r) + (0,) * len(tail),
            )
            out_spec = pl.BlockSpec(
                (tile0,) + tail,
                lambda r, idx_ref: (r,) + (0,) * len(tail),
            )
            dim_sem = ("parallel",)
        else:
            # Small slice: single whole-slice block (last two dims full-extent
            # so the (8,128) constraint is trivially satisfied).
            grid = (1,)
            in_spec = pl.BlockSpec(
                (pl.Squeezed(),) + tuple(rest),
                lambda r, idx_ref: (idx_ref[0],) + (0,) * len(rest),
            )
            out_spec = pl.BlockSpec(
                tuple(rest), lambda r, idx_ref: (0,) * len(rest)
            )
            dim_sem = ("arbitrary",)

    out = pl.pallas_call(
        _copy_kernel,
        out_shape=out_shape,
        grid_spec=pltpu.PrefetchScalarGridSpec(
            num_scalar_prefetch=1,
            grid=grid,
            in_specs=[in_spec],
            out_specs=out_spec,
        ),
        compiler_params=pltpu.CompilerParams(
            dimension_semantics=dim_sem,
            vmem_limit_bytes=32 * 1024 * 1024,
        ),
    )(idx, x2)

    return out.reshape(rest)


if __name__ == "__main__":
    key = jax.random.PRNGKey(0)
    k1, k2, k3, k4, k5 = jax.random.split(key, 5)

    # 1) Small stacked tensor: [num_items, B, S, H] = [3, 2, 8, 32].
    x = jax.random.normal(k1, (3, 2, 8, 32), dtype=jnp.float32)
    out = jax.block_until_ready(select_item(x, 1))
    ref = x[1]
    assert out.shape == ref.shape and out.dtype == ref.dtype
    assert bool(jnp.all(out == ref))

    # Negative index (Python semantics), same compiled kernel (scalar prefetch).
    out_n = jax.block_until_ready(select_item(x, -1))
    assert bool(jnp.all(out_n == x[-1]))

    # 2) Medium slice exercising the multi-step pipelined lane-dense grid:
    #    [2, 16, 512, 128] f32 -> lane-dense slab, sublane-aligned row tiles.
    y = jax.random.normal(k2, (2, 16, 512, 128), dtype=jnp.float32)
    out2 = jax.block_until_ready(select_item(y, 0))
    assert bool(jnp.all(out2 == y[0]))

    # 3) Fallback path: flattened slice not a multiple of 128 lanes.
    z = jax.random.normal(k3, (3, 2, 5, 7), dtype=jnp.float32)
    out3 = jax.block_until_ready(select_item(z, 2))
    assert bool(jnp.all(out3 == z[2]))

    # 4) bf16 path (packed sublanes -> row tiles are multiples of 16).
    w = jax.random.normal(k5, (2, 4, 64, 128), dtype=jnp.bfloat16)
    out4 = jax.block_until_ready(select_item(w, 1))
    assert bool(jnp.all(out4 == w[1]))

    # 5) Tuple input path (e.g. picking the LSTM output out of (out, (h, c))).
    tup = (jax.random.normal(k4, (2, 8, 32)), jax.random.normal(k1, (2, 32)))
    out_t = jax.block_until_ready(select_item(tup, 0))
    assert bool(jnp.all(out_t == tup[0]))

    print("KERNEL_OK")
</pallas_src>

<mosaic_0001>
module attributes {stable_mosaic.version = 11 : i64} {
  func.func @_copy_kernel(%arg0: i32, %arg1: memref<1xi32, #tpu.memory_space<smem>>, %arg2: memref<1x1x512xf32, #tpu.memory_space<vmem>>, %arg3: memref<1x512xf32, #tpu.memory_space<vmem>>) attributes {dimension_semantics = [#tpu.dimension_semantics<parallel>], iteration_bounds = array<i64: 1>, scalar_prefetch = 1 : i64, scratch_operands = 0 : i64, tpu.core_type = #tpu.core_type<tc>, window_params = [{transform_indices = @transform_0, window_bounds = array<i64: 1, 1, 512>}, {transform_indices = @transform_1, window_bounds = array<i64: 1, 512>}]} {
    %c0 = arith.constant 0 : index
    %c0_0 = arith.constant 0 : index
    %c0_1 = arith.constant 0 : index
    %0 = vector.load %arg2[%c0, %c0_0, %c0_1] : memref<1x1x512xf32, #tpu.memory_space<vmem>>, vector<1x1x512xf32>
    %1 = vector.shape_cast %0 : vector<1x1x512xf32> to vector<1x512xf32>
    %c0_2 = arith.constant 0 : index
    %c0_3 = arith.constant 0 : index
    %2 = vector.load %arg3[%c0_2, %c0_3] : memref<1x512xf32, #tpu.memory_space<vmem>>, vector<1x512xf32>
    tpu.vector_store %arg3[%c0_2, %c0_3], %1 {strides = array<i32>} : memref<1x512xf32, #tpu.memory_space<vmem>>, vector<1x512xf32>,
    return
  }
  func.func @transform_0(%arg0: i32, %arg1: memref<1xi32, #tpu.memory_space<smem>>) -> (i32, i32, i32) {
    %c0 = arith.constant 0 : index
    %0 = memref.load %arg1[%c0] : memref<1xi32, #tpu.memory_space<smem>>
    %c0_i32 = arith.constant 0 : i32
    %c0_i32_0 = arith.constant 0 : i32
    return %0, %arg0, %c0_i32 : i32, i32, i32
  }
  func.func @transform_1(%arg0: i32, %arg1: memref<1xi32, #tpu.memory_space<smem>>) -> (i32, i32) {
    %c0_i32 = arith.constant 0 : i32
    %c0_i32_0 = arith.constant 0 : i32
    return %arg0, %c0_i32 : i32, i32
  }
}

</mosaic_0001>

<llo_original>
// kernel: tpu_custom_call.1
$region0: #{tpu_custom_call.1}
  #allocation0 [shape = 'u32[]', space=smem, size = 0x4, offset = 0x4, fixed_abs, tag = 'smem constant byte address 0x4 - core index']
  #allocation1 [shape = 'u32[144,128]{1,0:T(1,128)}', space=vmem, size = 0x12000, scoped, tag = 'internal scratch']
  #allocation2 [shape = 's32[1]{0}', space=sflag, size = 0x4, scoped, tag = 'scoped memory for tpu_custom_call.1']
  #allocation3 [shape = 's32[1]{0:T(128)S(6)}', space=smem, size = 0x200, scoped, tag = 'prefetched SMEM operand 0']
  %s0 = inlined_call_operand.<no memory space> [shape: s32[1], index: 0, kind: input, shape index: {}]
  %s1 = inlined_call_operand.hbm [shape: f32[3,1,512], index: 1, kind: input, shape index: {}]
  %s2 = inlined_call_operand.hbm [shape: f32[1,512], index: 2, kind: output, shape index: {}]
  %s3 = sld [smem:[#allocation0]]
  $region18: #{tpu_custom_call.1} parent=0
    _
  %s5 = ssub.s32 1, %s3
  %s6 = scalar_select 0, %s5, %s3
  %7 = sst [smem:[#allocation3]] %s0
  $region1: #{tpu_custom_call.1} parent=0
    #allocation4 [shape = 'u8[2048]{0}', space=vmem, size = 0x800, scoped, tag = 'input window, operand 1, single buffered']
    #allocation5 [shape = 's32[1]{0}', space=sflag, size = 0x4, scoped, tag = 'scoped memory for tpu_custom_call.1']
    #allocation6 [shape = 's32[1]{0}', space=sflag, size = 0x4, scoped, tag = 'scoped memory for tpu_custom_call.1']
    #allocation7 [shape = 'u8[2048]{0}', space=vmem, size = 0x800, scoped, tag = 'output window, operand 0, single buffered']
    %8 = vsyncpa [#allocation5], 0
    %9 = vsyncpa [#allocation6], 0
    // Predicated region
    $region2: #{tpu_custom_call.1} parent=1 // pred_check
      _
    $region3: #{tpu_custom_call.1} parent=1 // pred_check_branch
      %11 = sbr.rel (0) target = $region5
    $region4: #{tpu_custom_call.1} parent=1 // pred_region
      %s12 = sld [smem:[#allocation3]]
      %s14 = ssub.s32 64, 64
      %15 = vsyncadd [#allocation5], %s14
      %s16 = smul.addr %s12, 4
      %s17 = smul.addr %s16, 16
      %s18 = scalar_lea.hbm %s1, %s17
      %s20 = sshll.u32 [#allocation4], 4
      %s21 = int_to_ptr.vmem [resolvable:$true] %s20
      %23 = dma.hbm_to_vmem [thread:$0]  %s18, 64, %s21, [#allocation5]
    $region5: #{tpu_custom_call.1} parent=1 // pred_fallthru
      _
    // Predicated region
    $region6: #{tpu_custom_call.1} parent=1 // pred_check
      _
    $region7: #{tpu_custom_call.1} parent=1 // pred_check_branch
      %25 = sbr.rel (0) target = $region9
    $region8: #{tpu_custom_call.1} parent=1 // pred_region
      %26 = dma.done [#allocation5], 64
    $region9: #{tpu_custom_call.1} parent=1 // pred_fallthru
      _
    %s27 = sld [smem:[#allocation3]]
    %v28 = vld [vmem:[#allocation4] sm:$0xf]
    %v29 = vlaneseq
    %vm30 = vcmp.ge.s32.totalorder %v29, 0
    %vm31 = vcmp.lt.s32.totalorder %v29, 512
    %vm32 = vmand %vm30, %vm31
    %33 = vst.msk [vmem:[#allocation7] sm:$0xf] %vm32, %v28
    // Predicated region
    $region10: #{tpu_custom_call.1} parent=1 // pred_check
      _
    $region11: #{tpu_custom_call.1} parent=1 // pred_check_branch
      %35 = sbr.rel (0) target = $region13
    $region12: #{tpu_custom_call.1} parent=1 // pred_region
      %s37 = ssub.s32 64, 64
      %38 = vsyncadd [#allocation6], %s37
      %s40 = sshll.u32 [#allocation7], 4
      %s41 = int_to_ptr.vmem [resolvable:$true] %s40
      %43 = dma.vmem_to_hbm [thread:$0]  %s41, 64, %s2, [#allocation6]
    $region13: #{tpu_custom_call.1} parent=1 // pred_fallthru
      _
    // Predicated region
    $region14: #{tpu_custom_call.1} parent=1 // pred_check
      _
    $region15: #{tpu_custom_call.1} parent=1 // pred_check_branch
      %45 = sbr.rel (0) target = $region17
    $region16: #{tpu_custom_call.1} parent=1 // pred_region
      %46 = dma.done [#allocation6], 64
    $region17: #{tpu_custom_call.1} parent=1 // pred_fallthru
      _
    %47 = vsyncpa [#allocation5], 1
    %48 = vsyncpa [#allocation6], 1

</llo_original>
